<compile_context>
chip_gen: v6e
topology: v6e:2x2x1
jax: 0.10.0
libtpu: 0.0.40
codegen_flags: <defaults>
</compile_context>

<pallas_src>
import functools

import jax
import jax.numpy as jnp
from jax.experimental import pallas as pl
from jax.experimental.pallas import tpu as pltpu


LN_EPS = 1e-5
NEG_BIG = -1e30                      # finite "−inf" for kv masking (avoids NaNs)
VMEM_LIMIT = 48 * 1024 * 1024        # explicit scoped-VMEM budget (<= v7x physical)


# --------------------------------------------------------------------------- helpers
def _layernorm(x, g, b, eps=LN_EPS):
    mu = jnp.mean(x, axis=-1, keepdims=True)
    var = jnp.mean((x - mu) ** 2, axis=-1, keepdims=True)
    return (x - mu) * jax.lax.rsqrt(var + eps) * g + b


def _rep_spec(arr):
    """Whole-array block, same block at every grid point (weights / biases)."""
    zero = (0,) * arr.ndim
    return pl.BlockSpec(arr.shape, lambda *_: zero)


def _seq_tiling(S):
    """Return (tile, padded_S).  Never produces a huge full-S block for long S."""
    for t in (256, 128):
        if S % t == 0:
            return t, S
    if S <= 256:                     # small sequence: one (full) tile is fine
        return S, S
    s_pad = ((S + 127) // 128) * 128  # long & unaligned: pad + mask
    return 128, s_pad


def _cparams(dims):
    return pltpu.CompilerParams(dimension_semantics=dims,
                                vmem_limit_bytes=VMEM_LIMIT)


# --------------------------------------------------------------------------- kernels
def _qkv_store(x_bf16, wqkv_ref, bqkv_ref, q_ref, k_ref, v_ref, nhead, hd):
    """One fused (ts,D)@(D,3D) matmul, then head-major split (once per tile)."""
    d = nhead * hd
    qkv = jnp.dot(x_bf16, wqkv_ref[...],
                  preferred_element_type=jnp.float32) + bqkv_ref[...]
    for h in range(nhead):           # static slices; projection-time only
        q_ref[0, h] = qkv[:, h * hd:(h + 1) * hd].astype(q_ref.dtype)
        k_ref[0, h] = qkv[:, d + h * hd:d + (h + 1) * hd].astype(k_ref.dtype)
        v_ref[0, h] = qkv[:, 2 * d + h * hd:2 * d + (h + 1) * hd].astype(v_ref.dtype)


def embed_qkv_kernel(emb_ref, mask_ref, g_ref, b_ref, wqkv_ref, bqkv_ref,
                     xn_ref, q_ref, k_ref, v_ref, *, nhead, hd):
    # Fused: LayerNorm(emb) * mask  -> xnorm (residual input), then QKV projection.
    xn = _layernorm(emb_ref[0], g_ref[...], b_ref[...]) * mask_ref[0]
    xn_ref[0] = xn
    _qkv_store(xn.astype(jnp.bfloat16), wqkv_ref, bqkv_ref,
               q_ref, k_ref, v_ref, nhead, hd)


def qkv_kernel(x_ref, wqkv_ref, bqkv_ref, q_ref, k_ref, v_ref, *, nhead, hd):
    _qkv_store(x_ref[0].astype(jnp.bfloat16), wqkv_ref, bqkv_ref,
               q_ref, k_ref, v_ref, nhead, hd)


def attn_ffn_kernel(x_ref, q_ref, k_ref, v_ref,
                    wo_ref, bo_ref, ln1g_ref, ln1b_ref,
                    w1_ref, b1_ref, w2_ref, b2_ref, ln2g_ref, ln2b_ref,
                    o_ref, m_sc, l_sc, acc_sc,
                    *, nhead, hd, tkv, s_valid, needs_mask):
    """Flash attention (head-batched) + out-proj + LN1 + FFN + LN2, fused.

    Grid = (batch, q_tile, kv_tile); kv_tile is the last ("arbitrary") reduction
    axis.  Scratch: m/l (nhead, tq, 1), acc (nhead, tq, hd).  The FFN runs in the
    finalize step on the LN1 output that is already resident in VMEM, so only one
    (B,S,D) activation is written per layer.
    """
    ki = pl.program_id(2)

    @pl.when(ki == 0)
    def _init():
        m_sc[...] = jnp.full_like(m_sc, NEG_BIG)
        l_sc[...] = jnp.zeros_like(l_sc)
        acc_sc[...] = jnp.zeros_like(acc_sc)

    q = q_ref[0]                      # (nhead, tq,  hd) bf16 (softmax scale folded)
    k = k_ref[0]                      # (nhead, tkv, hd) bf16
    v = v_ref[0]                      # (nhead, tkv, hd) bf16

    s = jnp.einsum('hqd,hkd->hqk', q, k,
                   preferred_element_type=jnp.float32)            # (nhead,tq,tkv)
    if needs_mask:                    # static flag; only when S was padded
        kv_pos = ki * tkv + jax.lax.broadcasted_iota(jnp.int32, (1, 1, tkv), 2)
        s = jnp.where(kv_pos < s_valid, s, NEG_BIG)

    m_prev = m_sc[...]                                             # (nhead,tq,1)
    m_new = jnp.maximum(m_prev, jnp.max(s, axis=-1, keepdims=True))
    alpha = jnp.exp(m_prev - m_new)
    p = jnp.exp(s - m_new)                                         # (nhead,tq,tkv)
    l_sc[...] = alpha * l_sc[...] + jnp.sum(p, axis=-1, keepdims=True)
    pv = jnp.einsum('hqk,hkd->hqd', p.astype(jnp.bfloat16), v,
                    preferred_element_type=jnp.float32)            # (nhead,tq,hd)
    acc_sc[...] = alpha * acc_sc[...] + pv
    m_sc[...] = m_new

    @pl.when(ki == pl.num_programs(2) - 1)
    def _finalize():
        inv_l = pl.reciprocal(l_sc[...], approx=True)
        ctx = (acc_sc[...] * inv_l).astype(jnp.bfloat16)           # (nhead,tq,hd)
        # Head concat folded into per-head partial out-projections (sublane
        # slices of wo_t; finalize-only, never inside the kv loop).
        attn = jnp.dot(ctx[0], wo_ref[0:hd, :],
                       preferred_element_type=jnp.float32)
        for h in range(1, nhead):
            attn = attn + jnp.dot(ctx[h], wo_ref[h * hd:(h + 1) * hd, :],
                                  preferred_element_type=jnp.float32)
        attn = attn + bo_ref[...]
        h1 = _layernorm(x_ref[0] + attn, ln1g_ref[...], ln1b_ref[...])
        # Fused FFN + residual + LayerNorm2.
        hid = jnp.dot(h1.astype(jnp.bfloat16), w1_ref[...],
                      preferred_element_type=jnp.float32) + b1_ref[...]
        hid = jnp.maximum(hid, 0.0)
        ffn = jnp.dot(hid.astype(jnp.bfloat16), w2_ref[...],
                      preferred_element_type=jnp.float32) + b2_ref[...]
        o_ref[0] = _layernorm(h1 + ffn, ln2g_ref[...], ln2b_ref[...])


def head_kernel(x_ref, w_ref, b_ref, o_ref):
    # cont_head as VPU multiply + lane reduction; lane-dense (B, ts) output.
    x = x_ref[...]                                   # (B, ts, D)
    w = w_ref[...]                                   # (1, D)
    o_ref[...] = jnp.sum(x * w[None, :, :], axis=-1) + b_ref[...]


# --------------------------------------------------------------------------- wrappers
def embed_qkv(emb, mask, norm_g, norm_b, lp, nhead, ts):
    B, S, D = emb.shape
    hd = D // nhead
    act_spec = pl.BlockSpec((1, ts, D), lambda b, s: (b, s, 0))
    hm_spec = pl.BlockSpec((1, nhead, ts, hd), lambda b, s: (b, 0, s, 0))
    qkv_shape = jax.ShapeDtypeStruct((B, nhead, S, hd), jnp.bfloat16)
    out_shape = (jax.ShapeDtypeStruct((B, S, D), jnp.float32),
                 qkv_shape, qkv_shape, qkv_shape)
    return pl.pallas_call(
        functools.partial(embed_qkv_kernel, nhead=nhead, hd=hd),
        out_shape=out_shape,
        grid=(B, S // ts),
        in_specs=[act_spec,
                  pl.BlockSpec((1, ts, 1), lambda b, s: (b, s, 0)),
                  _rep_spec(norm_g), _rep_spec(norm_b),
                  _rep_spec(lp["wqkv_t"]), _rep_spec(lp["bqkv"])],
        out_specs=(act_spec, hm_spec, hm_spec, hm_spec),
        compiler_params=_cparams(("parallel", "parallel")),
    )(emb, mask, norm_g, norm_b, lp["wqkv_t"], lp["bqkv"])


def qkv_project(x, lp, nhead, ts):
    B, S, D = x.shape
    hd = D // nhead
    act_spec = pl.BlockSpec((1, ts, D), lambda b, s: (b, s, 0))
    hm_spec = pl.BlockSpec((1, nhead, ts, hd), lambda b, s: (b, 0, s, 0))
    qkv_shape = jax.ShapeDtypeStruct((B, nhead, S, hd), jnp.bfloat16)
    return pl.pallas_call(
        functools.partial(qkv_kernel, nhead=nhead, hd=hd),
        out_shape=(qkv_shape, qkv_shape, qkv_shape),
        grid=(B, S // ts),
        in_specs=[act_spec, _rep_spec(lp["wqkv_t"]), _rep_spec(lp["bqkv"])],
        out_specs=(hm_spec, hm_spec, hm_spec),
        compiler_params=_cparams(("parallel", "parallel")),
    )(x, lp["wqkv_t"], lp["bqkv"])


def attention_ffn(x, q, k, v, lp, *, nhead, tq, tkv, s_valid):
    B, S, D = x.shape
    hd = D // nhead
    needs_mask = (S != s_valid)
    w_args = [lp["wo_t"], lp["bo"], lp["ln1_g"], lp["ln1_b"],
              lp["w1_t"], lp["b1"], lp["w2_t"], lp["b2"],
              lp["ln2_g"], lp["ln2_b"]]
    x_spec = pl.BlockSpec((1, tq, D), lambda b, qi, ki: (b, qi, 0))
    q_spec = pl.BlockSpec((1, nhead, tq, hd), lambda b, qi, ki: (b, 0, qi, 0))
    kv_spec = pl.BlockSpec((1, nhead, tkv, hd), lambda b, qi, ki: (b, 0, ki, 0))
    return pl.pallas_call(
        functools.partial(attn_ffn_kernel, nhead=nhead, hd=hd, tkv=tkv,
                          s_valid=s_valid, needs_mask=needs_mask),
        out_shape=jax.ShapeDtypeStruct((B, S, D), jnp.float32),
        grid=(B, S // tq, S // tkv),
        in_specs=[x_spec, q_spec, kv_spec, kv_spec] + [_rep_spec(w) for w in w_args],
        out_specs=x_spec,
        scratch_shapes=[pltpu.VMEM((nhead, tq, 1), jnp.float32),    # running max
                        pltpu.VMEM((nhead, tq, 1), jnp.float32),    # running sum
                        pltpu.VMEM((nhead, tq, hd), jnp.float32)],  # context acc
        compiler_params=_cparams(("parallel", "parallel", "arbitrary")),
    )(x, q, k, v, *w_args)


def cont_head(x, w, b, ts):
    B, S, D = x.shape
    return pl.pallas_call(
        head_kernel,
        out_shape=jax.ShapeDtypeStruct((B, S), jnp.float32),
        grid=(S // ts,),
        in_specs=[pl.BlockSpec((B, ts, D), lambda s: (0, s, 0)),
                  _rep_spec(w), _rep_spec(b)],
        out_specs=pl.BlockSpec((B, ts), lambda s: (0, s)),
        compiler_params=_cparams(("parallel",)),
    )(x, w, b)


def bioformer_forward(params, binned_expr, perturb_idx, non_zero_mask=None, *, nhead):
    B, S = binned_expr.shape
    ts, S_pad = _seq_tiling(S)
    # Embedding gathers stay in plain JAX.
    gene_ids = jnp.arange(S, dtype=jnp.int32)
    emb = (params["gene_emb"][gene_ids][None, :, :]
           + params["value_emb"][binned_expr]
           + params["perturb_emb"][perturb_idx][:, None, :]).astype(jnp.float32)
    if non_zero_mask is None:
        mask = jnp.ones((B, S, 1), jnp.float32)
    else:
        mask = non_zero_mask.astype(jnp.float32)[..., None]
    if S_pad != S:  # pad sequence (padded kv positions masked inside attention)
        pad = S_pad - S
        emb = jnp.pad(emb, ((0, 0), (0, pad), (0, 0)))
        mask = jnp.pad(mask, ((0, 0), (0, pad), (0, 0)))

    layers = params["layers"]
    # Layer 0: embedding LayerNorm + mask fused into the first QKV projection.
    x, q, k, v = embed_qkv(emb, mask, params["norm_g"], params["norm_b"],
                           layers[0], nhead, ts)
    for li, lp in enumerate(layers):
        if li > 0:
            q, k, v = qkv_project(x, lp, nhead, ts)
        x = attention_ffn(x, q, k, v, lp, nhead=nhead, tq=ts, tkv=ts, s_valid=S)
    # TODO(synk): dropout omitted (eval mode only).
    out = cont_head(x, params["head_w"], params["head_b"], ts)     # (B, S_pad)
    return out[:, :S]


# --------------------------------------------------------------------------- params
def _xavier(key, shape):
    fan_out, fan_in = shape[0], shape[1]
    bound = (6.0 / (fan_in + fan_out)) ** 0.5
    return jax.random.uniform(key, shape, jnp.float32, -bound, bound)


def init_params(key, vocab_size, num_perturbs, num_bins, d_model, num_layers, nhead):
    d_ff = 4 * d_model
    hd = d_model // nhead
    scale = 1.0 / (hd ** 0.5)        # folded into wq / bq (host-side constant fold)
    bf = jnp.bfloat16
    keys = jax.random.split(key, 4 + 4 * num_layers)
    ki = iter(keys)
    params = {
        "gene_emb": _xavier(next(ki), (vocab_size, d_model)),
        "value_emb": _xavier(next(ki), (num_bins, d_model)),
        "perturb_emb": _xavier(next(ki), (num_perturbs, d_model)),
        "norm_g": jnp.ones((1, d_model), jnp.float32),
        "norm_b": jnp.zeros((1, d_model), jnp.float32),
        "head_w": _xavier(next(ki), (1, d_model)),       # used on the VPU path
        "head_b": jnp.zeros((1, 1), jnp.float32),
        "layers": [],
    }
    for _ in range(num_layers):
        wqkv = _xavier(next(ki), (3 * d_model, d_model))  # torch in_proj_weight
        wo = _xavier(next(ki), (d_model, d_model))        # out_proj.weight
        w1 = _xavier(next(ki), (d_ff, d_model))           # linear1.weight
        w2 = _xavier(next(ki), (d_model, d_ff))           # linear2.weight
        wq_t = wqkv[:d_model].T * scale                   # fold softmax scale
        wk_t = wqkv[d_model:2 * d_model].T
        wv_t = wqkv[2 * d_model:].T
        bq = jnp.zeros((d_model,), jnp.float32) * scale
        bk = jnp.zeros((d_model,), jnp.float32)
        bv = jnp.zeros((d_model,), jnp.float32)
        params["layers"].append({
            # fused QKV weight (D, 3D) bf16 and bias (1, 3D) f32
            "wqkv_t": jnp.concatenate([wq_t, wk_t, wv_t], axis=1).astype(bf),
            "bqkv": jnp.concatenate([bq, bk, bv])[None, :],
            "wo_t": wo.T.astype(bf), "bo": jnp.zeros((1, d_model), jnp.float32),
            "ln1_g": jnp.ones((1, d_model), jnp.float32),
            "ln1_b": jnp.zeros((1, d_model), jnp.float32),
            "w1_t": w1.T.astype(bf), "b1": jnp.zeros((1, d_ff), jnp.float32),
            "w2_t": w2.T.astype(bf), "b2": jnp.zeros((1, d_model), jnp.float32),
            "ln2_g": jnp.ones((1, d_model), jnp.float32),
            "ln2_b": jnp.zeros((1, d_model), jnp.float32),
        })
    return params


# --------------------------------------------------------------------------- main
if __name__ == "__main__":
    vocab_size, num_perturbs, num_bins = 16, 4, 51
    d_model, nhead, num_layers = 32, 4, 2
    B, S = 2, 8

    key = jax.random.PRNGKey(0)
    pkey, k1, k2, k3 = jax.random.split(key, 4)

    params = init_params(pkey, vocab_size, num_perturbs, num_bins,
                         d_model, num_layers, nhead)
    binned_expr = jax.random.randint(k1, (B, S), 0, num_bins, dtype=jnp.int32)
    perturb_idx = jax.random.randint(k2, (B,), 0, num_perturbs, dtype=jnp.int32)
    non_zero_mask = (jax.random.uniform(k3, (B, S)) > 0.3).astype(jnp.float32)

    out = bioformer_forward(params, binned_expr, perturb_idx, non_zero_mask,
                            nhead=nhead)
    out = jax.block_until_ready(out)
    assert out.shape == (B, S) and out.dtype == jnp.float32
    assert bool(jnp.all(jnp.isfinite(out)))
    print("KERNEL_OK")
</pallas_src>

<mosaic_0001>
module attributes {stable_mosaic.version = 11 : i64} {
  func.func @embed_qkv_kernel(%arg0: i32, %arg1: i32, %arg2: memref<1x8x32xf32, #tpu.memory_space<vmem>>, %arg3: memref<1x8x1xf32, #tpu.memory_space<vmem>>, %arg4: memref<1x32xf32, #tpu.memory_space<vmem>>, %arg5: memref<1x32xf32, #tpu.memory_space<vmem>>, %arg6: memref<32x96xbf16, #tpu.memory_space<vmem>>, %arg7: memref<1x96xf32, #tpu.memory_space<vmem>>, %arg8: memref<1x8x32xf32, #tpu.memory_space<vmem>>, %arg9: memref<1x4x8x8xbf16, #tpu.memory_space<vmem>>, %arg10: memref<1x4x8x8xbf16, #tpu.memory_space<vmem>>, %arg11: memref<1x4x8x8xbf16, #tpu.memory_space<vmem>>) attributes {dimension_semantics = [#tpu.dimension_semantics<parallel>, #tpu.dimension_semantics<parallel>], iteration_bounds = array<i64: 2, 1>, scalar_prefetch = 0 : i64, scratch_operands = 0 : i64, tpu.core_type = #tpu.core_type<tc>, window_params = [{transform_indices = @transform_0, window_bounds = array<i64: 1, 8, 32>}, {transform_indices = @transform_1, window_bounds = array<i64: 1, 8, 1>}, {pipeline_mode = #tpu.pipeline_mode<synchronous>, transform_indices = @transform_2, window_bounds = array<i64: 1, 32>}, {pipeline_mode = #tpu.pipeline_mode<synchronous>, transform_indices = @transform_3, window_bounds = array<i64: 1, 32>}, {pipeline_mode = #tpu.pipeline_mode<synchronous>, transform_indices = @transform_4, window_bounds = array<i64: 32, 96>}, {pipeline_mode = #tpu.pipeline_mode<synchronous>, transform_indices = @transform_5, window_bounds = array<i64: 1, 96>}, {transform_indices = @transform_6, window_bounds = array<i64: 1, 8, 32>}, {transform_indices = @transform_7, window_bounds = array<i64: 1, 4, 8, 8>}, {transform_indices = @transform_8, window_bounds = array<i64: 1, 4, 8, 8>}, {transform_indices = @transform_9, window_bounds = array<i64: 1, 4, 8, 8>}]} {
    %c0 = arith.constant 0 : index
    %c0_0 = arith.constant 0 : index
    %c0_1 = arith.constant 0 : index
    %0 = vector.load %arg2[%c0, %c0_0, %c0_1] : memref<1x8x32xf32, #tpu.memory_space<vmem>>, vector<1x8x32xf32>
    %1 = vector.shape_cast %0 : vector<1x8x32xf32> to vector<8x32xf32>
    %c0_2 = arith.constant 0 : index
    %c0_3 = arith.constant 0 : index
    %2 = vector.load %arg4[%c0_2, %c0_3] : memref<1x32xf32, #tpu.memory_space<vmem>>, vector<1x32xf32>
    %c0_4 = arith.constant 0 : index
    %c0_5 = arith.constant 0 : index
    %3 = vector.load %arg5[%c0_4, %c0_5] : memref<1x32xf32, #tpu.memory_space<vmem>>, vector<1x32xf32>
    %cst = arith.constant dense<0.000000e+00> : vector<8xf32>
    %4 = vector.multi_reduction <add>, %1, %cst [1] : vector<8x32xf32> to vector<8xf32>
    %5 = vector.shape_cast %4 : vector<8xf32> to vector<8x1xf32>
    %cst_6 = arith.constant 3.200000e+01 : f32
    %6 = vector.broadcast %cst_6 : f32 to vector<8x1xf32>
    %7 = arith.divf %5, %6 : vector<8x1xf32>
    %8 = vector.broadcast %7 : vector<8x1xf32> to vector<8x32xf32>
    %9 = arith.subf %1, %8 : vector<8x32xf32>
    %10 = arith.mulf %9, %9 : vector<8x32xf32>
    %cst_7 = arith.constant dense<0.000000e+00> : vector<8xf32>
    %11 = vector.multi_reduction <add>, %10, %cst_7 [1] : vector<8x32xf32> to vector<8xf32>
    %12 = vector.shape_cast %11 : vector<8xf32> to vector<8x1xf32>
    %cst_8 = arith.constant 3.200000e+01 : f32
    %13 = vector.broadcast %cst_8 : f32 to vector<8x1xf32>
    %14 = arith.divf %12, %13 : vector<8x1xf32>
    %15 = vector.broadcast %7 : vector<8x1xf32> to vector<8x32xf32>
    %16 = arith.subf %1, %15 : vector<8x32xf32>
    %cst_9 = arith.constant 9.99999974E-6 : f32
    %17 = vector.broadcast %cst_9 : f32 to vector<8x1xf32>
    %18 = arith.addf %14, %17 : vector<8x1xf32>
    %19 = math.rsqrt %18 : vector<8x1xf32>
    %20 = vector.broadcast %19 : vector<8x1xf32> to vector<8x32xf32>
    %21 = arith.mulf %16, %20 : vector<8x32xf32>
    %22 = vector.broadcast %2 : vector<1x32xf32> to vector<8x32xf32>
    %23 = arith.mulf %21, %22 : vector<8x32xf32>
    %24 = vector.broadcast %3 : vector<1x32xf32> to vector<8x32xf32>
    %25 = arith.addf %23, %24 : vector<8x32xf32>
    %c0_10 = arith.constant 0 : index
    %c0_11 = arith.constant 0 : index
    %c0_12 = arith.constant 0 : index
    %26 = vector.load %arg3[%c0_10, %c0_11, %c0_12] : memref<1x8x1xf32, #tpu.memory_space<vmem>>, vector<1x8x1xf32>
    %27 = vector.shape_cast %26 : vector<1x8x1xf32> to vector<8x1xf32>
    %28 = vector.broadcast %27 : vector<8x1xf32> to vector<8x32xf32>
    %29 = arith.mulf %25, %28 : vector<8x32xf32>
    %c0_13 = arith.constant 0 : index
    %c0_14 = arith.constant 0 : index
    %c0_15 = arith.constant 0 : index
    %30 = vector.load %arg8[%c0_13, %c0_14, %c0_15] : memref<1x8x32xf32, #tpu.memory_space<vmem>>, vector<1x8x32xf32>
    %31 = vector.shape_cast %30 : vector<1x8x32xf32> to vector<8x32xf32>
    %32 = vector.shape_cast %29 : vector<8x32xf32> to vector<1x8x32xf32>
    tpu.vector_store %arg8[%c0_13, %c0_14, %c0_15], %32 {strides = array<i32>} : memref<1x8x32xf32, #tpu.memory_space<vmem>>, vector<1x8x32xf32>,
    %33 = arith.truncf %29 : vector<8x32xf32> to vector<8x32xbf16>
    %c0_16 = arith.constant 0 : index
    %c0_17 = arith.constant 0 : index
    %34 = vector.load %arg6[%c0_16, %c0_17] : memref<32x96xbf16, #tpu.memory_space<vmem>>, vector<32x96xbf16>
    %cst_18 = arith.constant dense<0.000000e+00> : vector<8x96xf32>
    %35 = tpu.matmul %33, %34, %cst_18 {dimension_numbers = #tpu.dot_dimension_numbers<[1], [0], [0], [1], [0, 0, 1, 1], [], []>} : vector<8x32xbf16>, vector<32x96xbf16>, vector<8x96xf32> -> vector<8x96xf32>
    %c0_19 = arith.constant 0 : index
    %c0_20 = arith.constant 0 : index
    %36 = vector.load %arg7[%c0_19, %c0_20] : memref<1x96xf32, #tpu.memory_space<vmem>>, vector<1x96xf32>
    %37 = vector.broadcast %36 : vector<1x96xf32> to vector<8x96xf32>
    %38 = arith.addf %35, %37 : vector<8x96xf32>
    %39 = vector.extract_strided_slice %38 {offsets = [0, 0], sizes = [8, 8], strides = [1, 1]} : vector<8x96xf32> to vector<8x8xf32>
    %40 = arith.truncf %39 : vector<8x8xf32> to vector<8x8xbf16>
    %c0_21 = arith.constant 0 : index
    %c0_22 = arith.constant 0 : index
    %c0_23 = arith.constant 0 : index
    %c0_24 = arith.constant 0 : index
    %41 = vector.load %arg9[%c0_21, %c0_22, %c0_23, %c0_24] : memref<1x4x8x8xbf16, #tpu.memory_space<vmem>>, vector<1x1x8x8xbf16>
    %42 = vector.shape_cast %41 : vector<1x1x8x8xbf16> to vector<8x8xbf16>
    %43 = vector.shape_cast %40 : vector<8x8xbf16> to vector<1x1x8x8xbf16>
    tpu.vector_store %arg9[%c0_21, %c0_22, %c0_23, %c0_24], %43 {strides = array<i32>} : memref<1x4x8x8xbf16, #tpu.memory_space<vmem>>, vector<1x1x8x8xbf16>,
    %44 = vector.extract_strided_slice %38 {offsets = [0, 32], sizes = [8, 8], strides = [1, 1]} : vector<8x96xf32> to vector<8x8xf32>
    %45 = arith.truncf %44 : vector<8x8xf32> to vector<8x8xbf16>
    %c0_25 = arith.constant 0 : index
    %c0_26 = arith.constant 0 : index
    %c0_27 = arith.constant 0 : index
    %c0_28 = arith.constant 0 : index
    %46 = vector.load %arg10[%c0_25, %c0_26, %c0_27, %c0_28] : memref<1x4x8x8xbf16, #tpu.memory_space<vmem>>, vector<1x1x8x8xbf16>
    %47 = vector.shape_cast %46 : vector<1x1x8x8xbf16> to vector<8x8xbf16>
    %48 = vector.shape_cast %45 : vector<8x8xbf16> to vector<1x1x8x8xbf16>
    tpu.vector_store %arg10[%c0_25, %c0_26, %c0_27, %c0_28], %48 {strides = array<i32>} : memref<1x4x8x8xbf16, #tpu.memory_space<vmem>>, vector<1x1x8x8xbf16>,
    %49 = vector.extract_strided_slice %38 {offsets = [0, 64], sizes = [8, 8], strides = [1, 1]} : vector<8x96xf32> to vector<8x8xf32>
    %50 = arith.truncf %49 : vector<8x8xf32> to vector<8x8xbf16>
    %c0_29 = arith.constant 0 : index
    %c0_30 = arith.constant 0 : index
    %c0_31 = arith.constant 0 : index
    %c0_32 = arith.constant 0 : index
    %51 = vector.load %arg11[%c0_29, %c0_30, %c0_31, %c0_32] : memref<1x4x8x8xbf16, #tpu.memory_space<vmem>>, vector<1x1x8x8xbf16>
    %52 = vector.shape_cast %51 : vector<1x1x8x8xbf16> to vector<8x8xbf16>
    %53 = vector.shape_cast %50 : vector<8x8xbf16> to vector<1x1x8x8xbf16>
    tpu.vector_store %arg11[%c0_29, %c0_30, %c0_31, %c0_32], %53 {strides = array<i32>} : memref<1x4x8x8xbf16, #tpu.memory_space<vmem>>, vector<1x1x8x8xbf16>,
    %54 = vector.extract_strided_slice %38 {offsets = [0, 8], sizes = [8, 8], strides = [1, 1]} : vector<8x96xf32> to vector<8x8xf32>
    %55 = arith.truncf %54 : vector<8x8xf32> to vector<8x8xbf16>
    %c0_33 = arith.constant 0 : index
    %c1 = arith.constant 1 : index
    %c0_34 = arith.constant 0 : index
    %c0_35 = arith.constant 0 : index
    %56 = vector.load %arg9[%c0_33, %c1, %c0_34, %c0_35] : memref<1x4x8x8xbf16, #tpu.memory_space<vmem>>, vector<1x1x8x8xbf16>
    %57 = vector.shape_cast %56 : vector<1x1x8x8xbf16> to vector<8x8xbf16>
    %58 = vector.shape_cast %55 : vector<8x8xbf16> to vector<1x1x8x8xbf16>
    tpu.vector_store %arg9[%c0_33, %c1, %c0_34, %c0_35], %58 {strides = array<i32>} : memref<1x4x8x8xbf16, #tpu.memory_space<vmem>>, vector<1x1x8x8xbf16>,
    %59 = vector.extract_strided_slice %38 {offsets = [0, 40], sizes = [8, 8], strides = [1, 1]} : vector<8x96xf32> to vector<8x8xf32>
    %60 = arith.truncf %59 : vector<8x8xf32> to vector<8x8xbf16>
    %c0_36 = arith.constant 0 : index
    %c1_37 = arith.constant 1 : index
    %c0_38 = arith.constant 0 : index
    %c0_39 = arith.constant 0 : index
    %61 = vector.load %arg10[%c0_36, %c1_37, %c0_38, %c0_39] : memref<1x4x8x8xbf16, #tpu.memory_space<vmem>>, vector<1x1x8x8xbf16>
    %62 = vector.shape_cast %61 : vector<1x1x8x8xbf16> to vector<8x8xbf16>
    %63 = vector.shape_cast %60 : vector<8x8xbf16> to vector<1x1x8x8xbf16>
    tpu.vector_store %arg10[%c0_36, %c1_37, %c0_38, %c0_39], %63 {strides = array<i32>} : memref<1x4x8x8xbf16, #tpu.memory_space<vmem>>, vector<1x1x8x8xbf16>,
    %64 = vector.extract_strided_slice %38 {offsets = [0, 72], sizes = [8, 8], strides = [1, 1]} : vector<8x96xf32> to vector<8x8xf32>
    %65 = arith.truncf %64 : vector<8x8xf32> to vector<8x8xbf16>
    %c0_40 = arith.constant 0 : index
    %c1_41 = arith.constant 1 : index
    %c0_42 = arith.constant 0 : index
    %c0_43 = arith.constant 0 : index
    %66 = vector.load %arg11[%c0_40, %c1_41, %c0_42, %c0_43] : memref<1x4x8x8xbf16, #tpu.memory_space<vmem>>, vector<1x1x8x8xbf16>
    %67 = vector.shape_cast %66 : vector<1x1x8x8xbf16> to vector<8x8xbf16>
    %68 = vector.shape_cast %65 : vector<8x8xbf16> to vector<1x1x8x8xbf16>
    tpu.vector_store %arg11[%c0_40, %c1_41, %c0_42, %c0_43], %68 {strides = array<i32>} : memref<1x4x8x8xbf16, #tpu.memory_space<vmem>>, vector<1x1x8x8xbf16>,
    %69 = vector.extract_strided_slice %38 {offsets = [0, 16], sizes = [8, 8], strides = [1, 1]} : vector<8x96xf32> to vector<8x8xf32>
    %70 = arith.truncf %69 : vector<8x8xf32> to vector<8x8xbf16>
    %c0_44 = arith.constant 0 : index
    %c2 = arith.constant 2 : index
    %c0_45 = arith.constant 0 : index
    %c0_46 = arith.constant 0 : index
    %71 = vector.load %arg9[%c0_44, %c2, %c0_45, %c0_46] : memref<1x4x8x8xbf16, #tpu.memory_space<vmem>>, vector<1x1x8x8xbf16>
    %72 = vector.shape_cast %71 : vector<1x1x8x8xbf16> to vector<8x8xbf16>
    %73 = vector.shape_cast %70 : vector<8x8xbf16> to vector<1x1x8x8xbf16>
    tpu.vector_store %arg9[%c0_44, %c2, %c0_45, %c0_46], %73 {strides = array<i32>} : memref<1x4x8x8xbf16, #tpu.memory_space<vmem>>, vector<1x1x8x8xbf16>,
    %74 = vector.extract_strided_slice %38 {offsets = [0, 48], sizes = [8, 8], strides = [1, 1]} : vector<8x96xf32> to vector<8x8xf32>
    %75 = arith.truncf %74 : vector<8x8xf32> to vector<8x8xbf16>
    %c0_47 = arith.constant 0 : index
    %c2_48 = arith.constant 2 : index
    %c0_49 = arith.constant 0 : index
    %c0_50 = arith.constant 0 : index
    %76 = vector.load %arg10[%c0_47, %c2_48, %c0_49, %c0_50] : memref<1x4x8x8xbf16, #tpu.memory_space<vmem>>, vector<1x1x8x8xbf16>
    %77 = vector.shape_cast %76 : vector<1x1x8x8xbf16> to vector<8x8xbf16>
    %78 = vector.shape_cast %75 : vector<8x8xbf16> to vector<1x1x8x8xbf16>
    tpu.vector_store %arg10[%c0_47, %c2_48, %c0_49, %c0_50], %78 {strides = array<i32>} : memref<1x4x8x8xbf16, #tpu.memory_space<vmem>>, vector<1x1x8x8xbf16>,
    %79 = vector.extract_strided_slice %38 {offsets = [0, 80], sizes = [8, 8], strides = [1, 1]} : vector<8x96xf32> to vector<8x8xf32>
    %80 = arith.truncf %79 : vector<8x8xf32> to vector<8x8xbf16>
    %c0_51 = arith.constant 0 : index
    %c2_52 = arith.constant 2 : index
    %c0_53 = arith.constant 0 : index
    %c0_54 = arith.constant 0 : index
    %81 = vector.load %arg11[%c0_51, %c2_52, %c0_53, %c0_54] : memref<1x4x8x8xbf16, #tpu.memory_space<vmem>>, vector<1x1x8x8xbf16>
    %82 = vector.shape_cast %81 : vector<1x1x8x8xbf16> to vector<8x8xbf16>
    %83 = vector.shape_cast %80 : vector<8x8xbf16> to vector<1x1x8x8xbf16>
    tpu.vector_store %arg11[%c0_51, %c2_52, %c0_53, %c0_54], %83 {strides = array<i32>} : memref<1x4x8x8xbf16, #tpu.memory_space<vmem>>, vector<1x1x8x8xbf16>,
    %84 = vector.extract_strided_slice %38 {offsets = [0, 24], sizes = [8, 8], strides = [1, 1]} : vector<8x96xf32> to vector<8x8xf32>
    %85 = arith.truncf %84 : vector<8x8xf32> to vector<8x8xbf16>
    %c0_55 = arith.constant 0 : index
    %c3 = arith.constant 3 : index
    %c0_56 = arith.constant 0 : index
    %c0_57 = arith.constant 0 : index
    %86 = vector.load %arg9[%c0_55, %c3, %c0_56, %c0_57] : memref<1x4x8x8xbf16, #tpu.memory_space<vmem>>, vector<1x1x8x8xbf16>
    %87 = vector.shape_cast %86 : vector<1x1x8x8xbf16> to vector<8x8xbf16>
    %88 = vector.shape_cast %85 : vector<8x8xbf16> to vector<1x1x8x8xbf16>
    tpu.vector_store %arg9[%c0_55, %c3, %c0_56, %c0_57], %88 {strides = array<i32>} : memref<1x4x8x8xbf16, #tpu.memory_space<vmem>>, vector<1x1x8x8xbf16>,
    %89 = vector.extract_strided_slice %38 {offsets = [0, 56], sizes = [8, 8], strides = [1, 1]} : vector<8x96xf32> to vector<8x8xf32>
    %90 = arith.truncf %89 : vector<8x8xf32> to vector<8x8xbf16>
    %c0_58 = arith.constant 0 : index
    %c3_59 = arith.constant 3 : index
    %c0_60 = arith.constant 0 : index
    %c0_61 = arith.constant 0 : index
    %91 = vector.load %arg10[%c0_58, %c3_59, %c0_60, %c0_61] : memref<1x4x8x8xbf16, #tpu.memory_space<vmem>>, vector<1x1x8x8xbf16>
    %92 = vector.shape_cast %91 : vector<1x1x8x8xbf16> to vector<8x8xbf16>
    %93 = vector.shape_cast %90 : vector<8x8xbf16> to vector<1x1x8x8xbf16>
    tpu.vector_store %arg10[%c0_58, %c3_59, %c0_60, %c0_61], %93 {strides = array<i32>} : memref<1x4x8x8xbf16, #tpu.memory_space<vmem>>, vector<1x1x8x8xbf16>,
    %94 = vector.extract_strided_slice %38 {offsets = [0, 88], sizes = [8, 8], strides = [1, 1]} : vector<8x96xf32> to vector<8x8xf32>
    %95 = arith.truncf %94 : vector<8x8xf32> to vector<8x8xbf16>
    %c0_62 = arith.constant 0 : index
    %c3_63 = arith.constant 3 : index
    %c0_64 = arith.constant 0 : index
    %c0_65 = arith.constant 0 : index
    %96 = vector.load %arg11[%c0_62, %c3_63, %c0_64, %c0_65] : memref<1x4x8x8xbf16, #tpu.memory_space<vmem>>, vector<1x1x8x8xbf16>
    %97 = vector.shape_cast %96 : vector<1x1x8x8xbf16> to vector<8x8xbf16>
    %98 = vector.shape_cast %95 : vector<8x8xbf16> to vector<1x1x8x8xbf16>
    tpu.vector_store %arg11[%c0_62, %c3_63, %c0_64, %c0_65], %98 {strides = array<i32>} : memref<1x4x8x8xbf16, #tpu.memory_space<vmem>>, vector<1x1x8x8xbf16>,
    return
  }
  func.func @transform_0(%arg0: i32, %arg1: i32) -> (i32, i32, i32) {
    %c0_i32 = arith.constant 0 : i32
    %c0_i32_0 = arith.constant 0 : i32
    return %arg0, %arg1, %c0_i32 : i32, i32, i32
  }
  func.func @transform_1(%arg0: i32, %arg1: i32) -> (i32, i32, i32) {
    %c0_i32 = arith.constant 0 : i32
    %c0_i32_0 = arith.constant 0 : i32
    return %arg0, %arg1, %c0_i32 : i32, i32, i32
  }
  func.func @transform_2(%arg0: i32, %arg1: i32) -> (i32, i32) {
    %c0_i32 = arith.constant 0 : i32
    %c0_i32_0 = arith.constant 0 : i32
    %c0_i32_1 = arith.constant 0 : i32
    return %c0_i32, %c0_i32_0 : i32, i32
  }
  func.func @transform_3(%arg0: i32, %arg1: i32) -> (i32, i32) {
    %c0_i32 = arith.constant 0 : i32
    %c0_i32_0 = arith.constant 0 : i32
    %c0_i32_1 = arith.constant 0 : i32
    return %c0_i32, %c0_i32_0 : i32, i32
  }
  func.func @transform_4(%arg0: i32, %arg1: i32) -> (i32, i32) {
    %c0_i32 = arith.constant 0 : i32
    %c0_i32_0 = arith.constant 0 : i32
    %c0_i32_1 = arith.constant 0 : i32
    return %c0_i32, %c0_i32_0 : i32, i32
  }
  func.func @transform_5(%arg0: i32, %arg1: i32) -> (i32, i32) {
    %c0_i32 = arith.constant 0 : i32
    %c0_i32_0 = arith.constant 0 : i32
    %c0_i32_1 = arith.constant 0 : i32
    return %c0_i32, %c0_i32_0 : i32, i32
  }
  func.func @transform_6(%arg0: i32, %arg1: i32) -> (i32, i32, i32) {
    %c0_i32 = arith.constant 0 : i32
    %c0_i32_0 = arith.constant 0 : i32
    return %arg0, %arg1, %c0_i32 : i32, i32, i32
  }
  func.func @transform_7(%arg0: i32, %arg1: i32) -> (i32, i32, i32, i32) {
    %c0_i32 = arith.constant 0 : i32
    %c0_i32_0 = arith.constant 0 : i32
    %c0_i32_1 = arith.constant 0 : i32
    return %arg0, %c0_i32, %arg1, %c0_i32_0 : i32, i32, i32, i32
  }
  func.func @transform_8(%arg0: i32, %arg1: i32) -> (i32, i32, i32, i32) {
    %c0_i32 = arith.constant 0 : i32
    %c0_i32_0 = arith.constant 0 : i32
    %c0_i32_1 = arith.constant 0 : i32
    return %arg0, %c0_i32, %arg1, %c0_i32_0 : i32, i32, i32, i32
  }
  func.func @transform_9(%arg0: i32, %arg1: i32) -> (i32, i32, i32, i32) {
    %c0_i32 = arith.constant 0 : i32
    %c0_i32_0 = arith.constant 0 : i32
    %c0_i32_1 = arith.constant 0 : i32
    return %arg0, %c0_i32, %arg1, %c0_i32_0 : i32, i32, i32, i32
  }
}

</mosaic_0001>

<llo_original>
// kernel: tpu_custom_call.1
$region0: #{tpu_custom_call.1}
  #allocation0 [shape = 'u32[]', space=smem, size = 0x4, offset = 0x4, fixed_abs, tag = 'smem constant byte address 0x4 - core index']
  #allocation1 [shape = 'u32[144,128]{1,0:T(1,128)}', space=vmem, size = 0x12000, scoped, tag = 'internal scratch']
  %s0 = inlined_call_operand.vmem [shape: f32[2,8,32], index: 0, kind: input, shape index: {}]
  %s1 = inlined_call_operand.vmem [shape: f32[2,8,1], index: 1, kind: input, shape index: {}]
  %s2 = inlined_call_operand.vmem [shape: f32[1,32], index: 2, kind: input, shape index: {}]
  %s3 = inlined_call_operand.vmem [shape: f32[1,32], index: 3, kind: input, shape index: {}]
  %s4 = inlined_call_operand.hbm [shape: bf16[32,96], index: 4, kind: input, shape index: {}]
  %s5 = inlined_call_operand.vmem [shape: f32[1,96], index: 5, kind: input, shape index: {}]
  %s6 = inlined_call_operand.hbm [shape: f32[2,8,32], index: 6, kind: output, shape index: {0}]
  %s7 = inlined_call_operand.hbm [shape: bf16[2,4,8,8], index: 7, kind: output, shape index: {1}]
  %s8 = inlined_call_operand.hbm [shape: bf16[2,4,8,8], index: 8, kind: output, shape index: {2}]
  %s9 = inlined_call_operand.hbm [shape: bf16[2,4,8,8], index: 9, kind: output, shape index: {3}]
  %10 = xla_tuple %s6, %s7, %s8, %s9
  %s11 = sld [smem:[#allocation0]]
  $region85: #{tpu_custom_call.1} parent=0
    _
  %s13 = ssub.s32 1, %s11
  %s14 = scalar_select 0, %s13, %s11
  $region1: #{tpu_custom_call.1} parent=0
    #allocation2 [shape = 'u8[8192]{0}', space=vmem, size = 0x2000, scoped, tag = 'input window, operand 4, single buffered']
    #allocation3 [shape = 's32[2]{0}', space=sflag, size = 0x8, scoped, tag = 'scoped memory for tpu_custom_call.1']
    #allocation4 [shape = 's32[2]{0}', space=sflag, size = 0x8, scoped, tag = 'scoped memory for tpu_custom_call.1']
    #allocation5 [shape = 'u8[8192]{0}', space=vmem, size = 0x2000, scoped, tag = 'output window, operand 0']
    #allocation6 [shape = 'u8[16384]{0}', space=vmem, size = 0x4000, scoped, tag = 'output window, operand 1']
    #allocation7 [shape = 's32[2]{0}', space=sflag, size = 0x8, scoped, tag = 'scoped memory for tpu_custom_call.1']
    #allocation8 [shape = 'u8[16384]{0}', space=vmem, size = 0x4000, scoped, tag = 'output window, operand 2']
    #allocation9 [shape = 'u8[16384]{0}', space=vmem, size = 0x4000, scoped, tag = 'output window, operand 3']
    #allocation10 [shape = 's32[2]{0}', space=sflag, size = 0x8, scoped, tag = 'scoped memory for tpu_custom_call.1']
    %15 = vsyncpa [#allocation3], 0
    %16 = vsyncpa [#allocation4], 0
    %s17 = scalar_lea.sflag [#allocation4], 1
    %18 = vsyncpa %s17, 0
    %19 = vsyncpa [#allocation7], 0
    %s20 = scalar_lea.sflag [#allocation7], 1
    %21 = vsyncpa %s20, 0
    %22 = vsyncpa [#allocation10], 0
    %s23 = scalar_lea.sflag [#allocation10], 1
    %24 = vsyncpa %s23, 0
    loop: start=0, step=1, limit=4
    $region2: #{tpu_custom_call.1} parent=1 // loop_pre_header
      _
    $region3: #{tpu_custom_call.1} parent=1 // loop_header
      %s26 = sphi 0, %s30
      %p27 = scmp.ge.s32.totalorder %s26, 4
      %s33 = sphi 0, %s45
      %s34 = sphi 0, %s41
      %s35 = sphi 0, %s33
      %s36 = sphi 0, %s34
      %s37 = sphi 0, %s35
      %s38 = sphi 0, %s36
      %s50 = sphi 0, %s52
      %s53 = sphi 0, %s50
      %s54 = sphi 0, %s53
      %s70 = sphi 0, %s54
      %s78 = sphi 0, %s80
      %s81 = sphi 0, %s78
      %s82 = sphi 0, %s81
      %s98 = sphi 0, %s82
      %s102 = sphi 0, %s102
      %s104 = sphi 0, %s102
      %s105 = sphi 0, %s104
      %s119 = sphi 0, %s105
      %s123 = sphi 0, %s123
      %s125 = sphi 0, %s123
      %s126 = sphi 0, %s125
      %s140 = sphi 0, %s126
      %s144 = sphi 0, %s144
      %s146 = sphi 0, %s144
      %s147 = sphi 0, %s146
      %s161 = sphi 0, %s147
      %s165 = sphi 0, %s165
      %s167 = sphi 0, %s165
      %s168 = sphi 0, %s167
      %s182 = sphi 0, %s168
      %s190 = sphi 0, %s192
      %s193 = sphi 0, %s190
      %s194 = sphi 0, %s193
      %s210 = sphi 0, %s194
      %s218 = sphi 0, %s220
      %s221 = sphi 0, %s218
      %s222 = sphi 0, %s221
      %s238 = sphi 0, %s222
      %s246 = sphi 0, %s248
      %s249 = sphi 0, %s246
      %s250 = sphi 0, %s249
      %s266 = sphi 0, %s250
      %s274 = sphi 0, %s276
      %s277 = sphi 0, %s274
      %s278 = sphi 0, %s277
      %s294 = sphi 0, %s278
    $region4: #{tpu_custom_call.1} parent=1 // loop_header_branch
      %29 = sbr.rel (%p27) target = $region8
    $region5: #{tpu_custom_call.1} parent=1 // loop_body
      %s31 = ssub.s32 %s26, 1
      %s32 = ssub.s32 %s26, 2
      %s39 = sadd.s32 1, %s34
      %p40 = scmp.ge.s32.totalorder %s39, 1
      %s41 = scalar_select %p40, 0, %s39
      %s42 = sadd.s32 1, %s33
      %s43 = scalar_select %p40, %s42, %s33
      %p44 = scmp.ge.s32.totalorder %s43, 2
      %s45 = scalar_select %p44, 0, %s43
      %s46 = ssub.s32 %s33, %s45
      %s47 = ssub.s32 %s34, %s41
      %s48 = sor.u32 %s46, %s47
      %p49 = scmp.eq.s32.totalorder %s48, 0
      %s51 = sadd.s32 %s50, 1
      %s52 = scalar_select %p49, %s50, %s51
      %p55 = pneg %p49
      %p56 = scmp.eq.s32.totalorder %s26, 1
      %p57 = por %p55, %p56
      %p58 = scmp.ne.s32.totalorder %s50, %s53
      %p59 = scmp.eq.s32.totalorder %s26, 0
      %p60 = por %p58, %p59
      %p61 = scmp.ne.s32.totalorder %s50, %s53
      %p62 = scmp.eq.s32.totalorder %s31, 1
      %p63 = por %p61, %p62
      %p64 = scmp.ne.s32.totalorder %s53, %s54
      %p65 = scmp.eq.s32.totalorder %s31, 0
      %p66 = por %p64, %p65
      %p67 = scmp.ne.s32.totalorder %s53, %s54
      %p68 = scmp.eq.s32.totalorder %s32, 1
      %p69 = por %p67, %p68
      %p71 = scmp.ne.s32.totalorder %s54, %s70
      %p72 = scmp.eq.s32.totalorder %s32, 0
      %p73 = por %p71, %p72
      %s74 = ssub.s32 %s33, %s45
      %s75 = ssub.s32 %s34, %s41
      %s76 = sor.u32 %s74, %s75
      %p77 = scmp.eq.s32.totalorder %s76, 0
      %s79 = sadd.s32 %s78, 1
      %s80 = scalar_select %p77, %s78, %s79
      %p83 = pneg %p77
      %p84 = scmp.eq.s32.totalorder %s26, 1
      %p85 = por %p83, %p84
      %p86 = scmp.ne.s32.totalorder %s78, %s81
      %p87 = scmp.eq.s32.totalorder %s26, 0
      %p88 = por %p86, %p87
      %p89 = scmp.ne.s32.totalorder %s78, %s81
      %p90 = scmp.eq.s32.totalorder %s31, 1
      %p91 = por %p89, %p90
      %p92 = scmp.ne.s32.totalorder %s81, %s82
      %p93 = scmp.eq.s32.totalorder %s31, 0
      %p94 = por %p92, %p93
      %p95 = scmp.ne.s32.totalorder %s81, %s82
      %p96 = scmp.eq.s32.totalorder %s32, 1
      %p97 = por %p95, %p96
      %p99 = scmp.ne.s32.totalorder %s82, %s98
      %p100 = scmp.eq.s32.totalorder %s32, 0
      %p101 = por %p99, %p100
      %s103 = sadd.s32 %s102, 1
      %p106 = scmp.eq.s32.totalorder %s26, 1
      %p107 = scmp.ne.s32.totalorder %s102, %s104
      %p108 = scmp.eq.s32.totalorder %s26, 0
      %p109 = por %p107, %p108
      %p110 = scmp.ne.s32.totalorder %s102, %s104
      %p111 = scmp.eq.s32.totalorder %s31, 1
      %p112 = por %p110, %p111
      %p113 = scmp.ne.s32.totalorder %s104, %s105
      %p114 = scmp.eq.s32.totalorder %s31, 0
      %p115 = por %p113, %p114
      %p116 = scmp.ne.s32.totalorder %s104, %s105
      %p117 = scmp.eq.s32.totalorder %s32, 1
      %p118 = por %p116, %p117
      %p120 = scmp.ne.s32.totalorder %s105, %s119
      %p121 = scmp.eq.s32.totalorder %s32, 0
      %p122 = por %p120, %p121
      %s124 = sadd.s32 %s123, 1
      %p127 = scmp.eq.s32.totalorder %s26, 1
      %p128 = scmp.ne.s32.totalorder %s123, %s125
      %p129 = scmp.eq.s32.totalorder %s26, 0
      %p130 = por %p128, %p129
      %p131 = scmp.ne.s32.totalorder %s123, %s125
      %p132 = scmp.eq.s32.totalorder %s31, 1
      %p133 = por %p131, %p132
      %p134 = scmp.ne.s32.totalorder %s125, %s126
      %p135 = scmp.eq.s32.totalorder %s31, 0
      %p136 = por %p134, %p135
      %p137 = scmp.ne.s32.totalorder %s125, %s126
      %p138 = scmp.eq.s32.totalorder %s32, 1
      %p139 = por %p137, %p138
      %p141 = scmp.ne.s32.totalorder %s126, %s140
      %p142 = scmp.eq.s32.totalorder %s32, 0
      %p143 = por %p141, %p142
      %s145 = sadd.s32 %s144, 1
      %p148 = scmp.eq.s32.totalorder %s26, 1
      %p149 = scmp.ne.s32.totalorder %s144, %s146
      %p150 = scmp.eq.s32.totalorder %s26, 0
      %p151 = por %p149, %p150
      %p152 = scmp.ne.s32.totalorder %s144, %s146
      %p153 = scmp.eq.s32.totalorder %s31, 1
      %p154 = por %p152, %p153
      %p155 = scmp.ne.s32.totalorder %s146, %s147
      %p156 = scmp.eq.s32.totalorder %s31, 0
      %p157 = por %p155, %p156
      %p158 = scmp.ne.s32.totalorder %s146, %s147
      %p159 = scmp.eq.s32.totalorder %s32, 1
      %p160 = por %p158, %p159
      %p162 = scmp.ne.s32.totalorder %s147, %s161
      %p163 = scmp.eq.s32.totalorder %s32, 0
      %p164 = por %p162, %p163
      %s166 = sadd.s32 %s165, 1
      %p169 = scmp.eq.s32.totalorder %s26, 1
      %p170 = scmp.ne.s32.totalorder %s165, %s167
      %p171 = scmp.eq.s32.totalorder %s26, 0
      %p172 = por %p170, %p171
      %p173 = scmp.ne.s32.totalorder %s165, %s167
      %p174 = scmp.eq.s32.totalorder %s31, 1
      %p175 = por %p173, %p174
      %p176 = scmp.ne.s32.totalorder %s167, %s168
      %p177 = scmp.eq.s32.totalorder %s31, 0
      %p178 = por %p176, %p177
      %p179 = scmp.ne.s32.totalorder %s167, %s168
      %p180 = scmp.eq.s32.totalorder %s32, 1
      %p181 = por %p179, %p180
      %p183 = scmp.ne.s32.totalorder %s168, %s182
      %p184 = scmp.eq.s32.totalorder %s32, 0
      %p185 = por %p183, %p184
      %s186 = ssub.s32 %s33, %s45
      %s187 = ssub.s32 %s34, %s41
      %s188 = sor.u32 %s186, %s187
      %p189 = scmp.eq.s32.totalorder %s188, 0
      %s191 = sadd.s32 %s190, 1
      %s192 = scalar_select %p189, %s190, %s191
      %p195 = pneg %p189
      %p196 = scmp.eq.s32.totalorder %s26, 1
      %p197 = por %p195, %p196
      %p198 = scmp.ne.s32.totalorder %s190, %s193
      %p199 = scmp.eq.s32.totalorder %s26, 0
      %p200 = por %p198, %p199
      %p201 = scmp.ne.s32.totalorder %s190, %s193
      %p202 = scmp.eq.s32.totalorder %s31, 1
      %p203 = por %p201, %p202
      %p204 = scmp.ne.s32.totalorder %s193, %s194
      %p205 = scmp.eq.s32.totalorder %s31, 0
      %p206 = por %p204, %p205
      %p207 = scmp.ne.s32.totalorder %s193, %s194
      %p208 = scmp.eq.s32.totalorder %s32, 1
      %p209 = por %p207, %p208
      %p211 = scmp.ne.s32.totalorder %s194, %s210
      %p212 = scmp.eq.s32.totalorder %s32, 0
      %p213 = por %p211, %p212
      %s214 = ssub.s32 %s33, %s45
      %s215 = ssub.s32 %s34, %s41
      %s216 = sor.u32 %s214, %s215
      %p217 = scmp.eq.s32.totalorder %s216, 0
      %s219 = sadd.s32 %s218, 1
      %s220 = scalar_select %p217, %s218, %s219
      %p223 = pneg %p217
      %p224 = scmp.eq.s32.totalorder %s26, 1
      %p225 = por %p223, %p224
      %p226 = scmp.ne.s32.totalorder %s218, %s221
      %p227 = scmp.eq.s32.totalorder %s26, 0
      %p228 = por %p226, %p227
      %p229 = scmp.ne.s32.totalorder %s218, %s221
      %p230 = scmp.eq.s32.totalorder %s31, 1
      %p231 = por %p229, %p230
      %p232 = scmp.ne.s32.totalorder %s221, %s222
      %p233 = scmp.eq.s32.totalorder %s31, 0
      %p234 = por %p232, %p233
      %p235 = scmp.ne.s32.totalorder %s221, %s222
      %p236 = scmp.eq.s32.totalorder %s32, 1
      %p237 = por %p235, %p236
      %p239 = scmp.ne.s32.totalorder %s222, %s238
      %p240 = scmp.eq.s32.totalorder %s32, 0
      %p241 = por %p239, %p240
      %s242 = ssub.s32 %s33, %s45
      %s243 = ssub.s32 %s34, %s41
      %s244 = sor.u32 %s242, %s243
      %p245 = scmp.eq.s32.totalorder %s244, 0
      %s247 = sadd.s32 %s246, 1
      %s248 = scalar_select %p245, %s246, %s247
      %p251 = pneg %p245
      %p252 = scmp.eq.s32.totalorder %s26, 1
      %p253 = por %p251, %p252
      %p254 = scmp.ne.s32.totalorder %s246, %s249
      %p255 = scmp.eq.s32.totalorder %s26, 0
      %p256 = por %p254, %p255
      %p257 = scmp.ne.s32.totalorder %s246, %s249
      %p258 = scmp.eq.s32.totalorder %s31, 1
      %p259 = por %p257, %p258
      %p260 = scmp.ne.s32.totalorder %s249, %s250
      %p261 = scmp.eq.s32.totalorder %s31, 0
      %p262 = por %p260, %p261
      %p263 = scmp.ne.s32.totalorder %s249, %s250
      %p264 = scmp.eq.s32.totalorder %s32, 1
      %p265 = por %p263, %p264
      %p267 = scmp.ne.s32.totalorder %s250, %s266
      %p268 = scmp.eq.s32.totalorder %s32, 0
      %p269 = por %p267, %p268
      %s270 = ssub.s32 %s33, %s45
      %s271 = ssub.s32 %s34, %s41
      %s272 = sor.u32 %s270, %s271
      %p273 = scmp.eq.s32.totalorder %s272, 0
      %s275 = sadd.s32 %s274, 1
      %s276 = scalar_select %p273, %s274, %s275
      %p279 = pneg %p273
      %p280 = scmp.eq.s32.totalorder %s26, 1
      %p281 = por %p279, %p280
      %p282 = scmp.ne.s32.totalorder %s274, %s277
      %p283 = scmp.eq.s32.totalorder %s26, 0
      %p284 = por %p282, %p283
      %p285 = scmp.ne.s32.totalorder %s274, %s277
      %p286 = scmp.eq.s32.totalorder %s31, 1
      %p287 = por %p285, %p286
      %p288 = scmp.ne.s32.totalorder %s277, %s278
      %p289 = scmp.eq.s32.totalorder %s31, 0
      %p290 = por %p288, %p289
      %p291 = scmp.ne.s32.totalorder %s277, %s278
      %p292 = scmp.eq.s32.totalorder %s32, 1
      %p293 = por %p291, %p292
      %p295 = scmp.ne.s32.totalorder %s278, %s294
      %p296 = scmp.eq.s32.totalorder %s32, 0
      %p297 = por %p295, %p296
      %p298 = scmp.le.s32.totalorder 1, %s26
      %p299 = scmp.lt.s32.totalorder %s26, 3
      %p300 = pnand %p298, %p299
      %p301 = pneg %p300
      // Predicated region
      $region9: #{tpu_custom_call.1} parent=5 // pred_check
        _
      $region10: #{tpu_custom_call.1} parent=5 // pred_check_branch
        %303 = sbr.rel (%p300) target = $region12
      $region11: #{tpu_custom_call.1} parent=5 // pred_region
        %s304 = ssub.s32 %s26, 1
        // Predicated region
        $region13: #{tpu_custom_call.1} parent=11 // pred_check
          %p305 = pneg %p115
        $region14: #{tpu_custom_call.1} parent=11 // pred_check_branch
          %307 = sbr.rel (%p305) target = $region16
        $region15: #{tpu_custom_call.1} parent=11 // pred_region
          _
        $region16: #{tpu_custom_call.1} parent=11 // pred_fallthru
          _
        // Predicated region
        $region17: #{tpu_custom_call.1} parent=11 // pred_check
          %p308 = pneg %p136
        $region18: #{tpu_custom_call.1} parent=11 // pred_check_branch
          %310 = sbr.rel (%p308) target = $region20
        $region19: #{tpu_custom_call.1} parent=11 // pred_region
          _
        $region20: #{tpu_custom_call.1} parent=11 // pred_fallthru
          _
        // Predicated region
        $region21: #{tpu_custom_call.1} parent=11 // pred_check
          %p311 = pneg %p157
        $region22: #{tpu_custom_call.1} parent=11 // pred_check_branch
          %313 = sbr.rel (%p311) target = $region24
        $region23: #{tpu_custom_call.1} parent=11 // pred_region
          %s315 = ssub.s32 256, 256
          %316 = vsyncadd [#allocation3], %s315
          %s317 = sshll.u32 [#allocation2], 4
          %s318 = int_to_ptr.vmem [resolvable:$true] %s317
          %323 = dma.hbm_to_vmem [thread:$0]  %s4, 256, %s318, [#allocation3], 64, 64, 4
        $region24: #{tpu_custom_call.1} parent=11 // pred_fallthru
          _
        // Predicated region
        $region25: #{tpu_custom_call.1} parent=11 // pred_check
          %p324 = pneg %p178
        $region26: #{tpu_custom_call.1} parent=11 // pred_check_branch
          %326 = sbr.rel (%p324) target = $region28
        $region27: #{tpu_custom_call.1} parent=11 // pred_region
          _
        $region28: #{tpu_custom_call.1} parent=11 // pred_fallthru
          _
      $region12: #{tpu_custom_call.1} parent=5 // pred_fallthru
        _
      %p327 = scmp.lt.s32.totalorder %s26, 2
      // Predicated region
      $region29: #{tpu_custom_call.1} parent=5 // pred_check
        %p328 = pneg %p327
      $region30: #{tpu_custom_call.1} parent=5 // pred_check_branch
        %330 = sbr.rel (%p328) target = $region32
      $region31: #{tpu_custom_call.1} parent=5 // pred_region
        // Predicated region
        $region33: #{tpu_custom_call.1} parent=31 // pred_check
          %p331 = pneg %p60
        $region34: #{tpu_custom_call.1} parent=31 // pred_check_branch
          %333 = sbr.rel (%p331) target = $region36
        $region35: #{tpu_custom_call.1} parent=31 // pred_region
          %p334 = scmp.lt.s32.totalorder %s33, 1
          %s335 = scalar_select %p334, %s33, 1
          %p336 = scmp.lt.s32.totalorder %s34, 0
          %s337 = scalar_select %p336, %s34, 0
          %s338 = sadd.s32 %s337, %s335
          %s339 = smul.addr %s338, 8
          %s340 = scalar_lea.vmem %s0, %s339
        $region36: #{tpu_custom_call.1} parent=31 // pred_fallthru
          _
        // Predicated region
        $region37: #{tpu_custom_call.1} parent=31 // pred_check
          %p341 = pneg %p88
        $region38: #{tpu_custom_call.1} parent=31 // pred_check_branch
          %343 = sbr.rel (%p341) target = $region40
        $region39: #{tpu_custom_call.1} parent=31 // pred_region
          %p344 = scmp.lt.s32.totalorder %s33, 1
          %s345 = scalar_select %p344, %s33, 1
          %p346 = scmp.lt.s32.totalorder %s34, 0
          %s347 = scalar_select %p346, %s34, 0
          %s348 = sadd.s32 %s347, %s345
          %s349 = smul.addr %s348, 8
          %s350 = scalar_lea.vmem %s1, %s349
        $region40: #{tpu_custom_call.1} parent=31 // pred_fallthru
          _
      $region32: #{tpu_custom_call.1} parent=5 // pred_fallthru
        _
      %p351 = scmp.le.s32.totalorder 1, %s26
      %p352 = scmp.lt.s32.totalorder %s26, 3
      %p353 = pnand %p351, %p352
      %p354 = pneg %p353
      // Predicated region
      $region41: #{tpu_custom_call.1} parent=5 // pred_check
        _
      $region42: #{tpu_custom_call.1} parent=5 // pred_check_branch
        %356 = sbr.rel (%p353) target = $region44
      $region43: #{tpu_custom_call.1} parent=5 // pred_region
        %s357 = ssub.s32 %s26, 1
        // Predicated region
        $region45: #{tpu_custom_call.1} parent=43 // pred_check
          %p358 = pneg %p157
        $region46: #{tpu_custom_call.1} parent=43 // pred_check_branch
          %360 = sbr.rel (%p358) target = $region48
        $region47: #{tpu_custom_call.1} parent=43 // pred_region
          %361 = dma.done [#allocation3], 256
        $region48: #{tpu_custom_call.1} parent=43 // pred_fallthru
          _
        %p362 = scmp.lt.s32.totalorder %s35, 1
        %s363 = scalar_select %p362, %s35, 1
        %p364 = scmp.lt.s32.totalorder %s36, 0
        %s365 = scalar_select %p364, %s36, 0
        %s366 = sadd.s32 %s365, %s363
        %s367 = smul.addr %s366, 8
        %s368 = scalar_lea.vmem %s0, %s367
        %p369 = pneg %p66
        %p370 = pneg %p63
        %p371 = scmp.lt.s32.totalorder %s35, 1
        %s372 = scalar_select %p371, %s35, 1
        %p373 = scmp.lt.s32.totalorder %s36, 0
        %s374 = scalar_select %p373, %s36, 0
        %s375 = sadd.s32 %s374, %s372
        %s376 = smul.addr %s375, 8
        %s377 = scalar_lea.vmem %s1, %s376
        %p378 = pneg %p94
        %p379 = pneg %p91
        %p380 = pneg %p115
        %p381 = pneg %p112
        %p382 = pneg %p136
        %p383 = pneg %p133
        %p384 = pneg %p157
        %p385 = pneg %p154
        %p386 = pneg %p178
        %p387 = pneg %p175
        %p388 = pneg %p206
        %p389 = pneg %p203
        %s390 = sand.u32 %s193, 1
        %s391 = scalar_lea.sflag [#allocation4], %s390
        %s392 = sand.u32 %s193, 1
        %s393 = smul.addr %s392, 8
        %s394 = scalar_lea.vmem [#allocation5], %s393
        %p395 = pneg %p234
        %p396 = pneg %p231
        %s397 = sand.u32 %s31, 1
        %s398 = scalar_lea.sflag [#allocation7], %s397
        %s399 = sand.u32 %s221, 1
        %s400 = smul.addr %s399, 16
        %s401 = scalar_lea.vmem [#allocation6], %s400
        %p402 = pneg %p262
        %p403 = pneg %p259
        %s404 = sand.u32 %s31, 1
        %s405 = scalar_lea.sflag [#allocation7], %s404
        %s406 = sand.u32 %s249, 1
        %s407 = smul.addr %s406, 16
        %s408 = scalar_lea.vmem [#allocation8], %s407
        %p409 = pneg %p290
        %p410 = pneg %p287
        %s411 = sand.u32 %s277, 1
        %s412 = scalar_lea.sflag [#allocation10], %s411
        %s413 = sand.u32 %s277, 1
        %s414 = smul.addr %s413, 16
        %s415 = scalar_lea.vmem [#allocation9], %s414
        %p416 = scmp.lt.s32.totalorder %s35, 1
        %s417 = scalar_select %p416, %s35, 1
        %p418 = scmp.lt.s32.totalorder %s36, 0
        %s419 = scalar_select %p418, %s36, 0
        %s420 = sadd.s32 %s419, %s417
        %s421 = smul.addr %s420, 8
        %s422 = scalar_lea.vmem %s0, %s421
        %p423 = scmp.lt.s32.totalorder %s35, 1
        %s424 = scalar_select %p423, %s35, 1
        %p425 = scmp.lt.s32.totalorder %s36, 0
        %s426 = scalar_select %p425, %s36, 0
        %s427 = sadd.s32 %s426, %s424
        %s428 = smul.addr %s427, 8
        %s429 = scalar_lea.vmem %s1, %s428
        %v431 = vld [vmem:[%s422] sm:$0xff]
        %v432 = vld [vmem:[%s2] sm:$0x1]
        %v433 = vld [vmem:[%s3] sm:$0x1]
        %vm434 = vcmask 261120
        %v435 = vsel %vm434, %v431, 0.0
        %436 = vadd.xlane.f32.xlu0 %v435
        %v437 = vpop.xlane.xlu0 %436
        %v438 = vrcp.pop 32.0
        %v439 = vmul.f32 %v437, %v438
        %v440 = vsub.f32 %v431, %v439
        %v441 = vmul.f32 %v440, %v440
        %v442 = vsel %vm434, %v441, 0.0
        %443 = vadd.xlane.f32.xlu0 %v442
        %v444 = vpop.xlane.xlu0 %443
        %v445 = vmul.f32 %v444, %v438
        %v446 = vadd.f32 %v445, 1e-05
        %v447 = vrsqrt.pop %v446
        %v448 = vmul.f32 %v440, %v447
        %v450 = vlaneseq
        %v451 = vshrl.u32 %v450, 7
        %v452 = vsub.s32 0, %v451
        %v453 = vrot.slane %v432, %v452
        %v455 = vmul.f32 %v448, %v453
        %v457 = vlaneseq
        %v458 = vshrl.u32 %v457, 7
        %v459 = vsub.s32 0, %v458
        %v460 = vrot.slane %v433, %v459
        %v462 = vadd.f32 %v455, %v460
        %v463 = vld [vmem:[%s429] sm:$0xff]
        %465 = vset.pattern.permute.xlu0 0
        %466 = vperm.xlu0 %465, %v463
        %v467 = vpop.permute.xlu0 %466
        %v469 = vmul.f32 %v462, %v467
        %470 = vst.msk [vmem:[%s394] sm:$0xff] %vm434, %v469
        %v471 = vpack.c.bf16 %v469, %v469
        %v472 = vld [vmem:[#allocation2] sm:$0xf]
        %v473 = vld [vmem:[#allocation2 + $0x4] sm:$0xf]
        %v474 = vld [vmem:[#allocation2 + $0x8] sm:$0xf]
        %v475 = vld [vmem:[#allocation2 + $0xc] sm:$0xf]
        %v476 = vld [vmem:[%s5] sm:$0x1]
        %v478 = vlaneseq
        %v479 = vshrl.u32 %v478, 7
        %v480 = vsub.s32 0, %v479
        %v481 = vrot.slane %v476, %v480
        %v487 = vunpack.c.l.b16 %v472
        %v488 = vunpack.c.l.b16 %v473
        %v489 = vunpack.c.l.b16 %v474
        %v490 = vunpack.c.l.b16 %v475
        %v491 = vpack.c.b16 %v488, %v487
        %v492 = vpack.c.b16 %v490, %v489
        %v496 = vsel %vm434, %v471, 0
        %498 = vmatprep.subr.bf16.mxu0 0
        %499 = vmatpush1.bf16.msra.mxu0 0
        %500 = vmatprep.subr.bf16.mxu0 0
        %501 = vmatpush1.bf16.msra.mxu0 0
        %502 = vmatprep.subr.bf16.mxu0 0
        %503 = vmatpush1.bf16.msra.mxu0 0
        %504 = vmatprep.subr.bf16.mxu0 0
        %505 = vmatpush1.bf16.msra.mxu0 0
        %506 = vmatprep.subr.bf16.mxu0 0
        %507 = vmatpush1.bf16.msra.mxu0 0
        %508 = vmatprep.subr.bf16.mxu0 0
        %509 = vmatpush1.bf16.msra.mxu0 0
        %510 = vmatprep.subr.bf16.mxu0 0
        %511 = vmatpush1.bf16.msra.mxu0 %v492
        %512 = vmatprep.subr.bf16.mxu0 0
        %513 = vmatpush1.bf16.msra.mxu0 %v491
        %514 = vmatprep.subr.bf16.mxu0 0
        %515 = vmatpush2.bf16.msra.mxu0 0
        %516 = vmatprep.subr.bf16.mxu0 0
        %517 = vmatpush2.bf16.msra.mxu0 0
        %518 = vmatprep.subr.bf16.mxu0 0
        %519 = vmatpush2.bf16.msra.mxu0 0
        %520 = vmatprep.subr.bf16.mxu0 0
        %521 = vmatpush2.bf16.msra.mxu0 0
        %522 = vmatprep.subr.bf16.mxu0 0
        %523 = vmatpush2.bf16.msra.mxu0 0
        %524 = vmatprep.subr.bf16.mxu0 0
        %525 = vmatpush2.bf16.msra.mxu0 0
        %526 = vmatprep.subr.bf16.mxu0 0
        %527 = vmatpush2.bf16.msra.mxu0 0
        %528 = vmatprep.subr.bf16.mxu0 0
        %529 = vmatpush2.bf16.msra.mxu0 0
        %530 = vmatprep.mubr.bf16.mxu0 0
        %531 = vmatmul.mubr.bf16.gmra.mxu0 %v496
        %v532 = vpop.f32.mrf.mxu0
        %v533 = vadd.f32 %v481, %v532
        %v534 = vpop.f32.mrf.mxu0
        %v535 = vpop.f32.mrf.mxu0
        %v536 = vpop.f32.mrf.mxu0
        %537 = vdwg.mxu0
        %v538 = vpack.c.bf16 %v533, %v533
        %vm539 = vcmask 60416
        %540 = vst.msk [vmem:[%s401] sm:$0xf] %vm539, %v538
        %v542 = vunpack.c.l.b16 %v538
        %v543 = vpack.c.b16 %v542, %v542
        %544 = vrot.lane.b32.xlu0 %v543, 96
        %v545 = vpop.permute.xlu0 %544
        %547 = vst.msk [vmem:[%s408] sm:$0xf] %vm539, %v545
        %548 = vrot.lane.b32.xlu0 %v543, 64
        %v549 = vpop.permute.xlu0 %548
        %551 = vst.msk [vmem:[%s415] sm:$0xf] %vm539, %v549
        %552 = vrot.lane.b32.xlu0 %v543, 120
        %v553 = vpop.permute.xlu0 %552
        %s555 = scalar_lea.vmem %s401, 4 [#allocation6]
        %556 = vst.msk [vmem:[%s555] sm:$0xf] %vm539, %v553
        %557 = vrot.lane.b32.xlu0 %v543, 88
        %v558 = vpop.permute.xlu0 %557
        %s560 = scalar_lea.vmem %s408, 4 [#allocation8]
        %561 = vst.msk [vmem:[%s560] sm:$0xf] %vm539, %v558
        %562 = vrot.lane.b32.xlu0 %v543, 56
        %v563 = vpop.permute.xlu0 %562
        %s565 = scalar_lea.vmem %s415, 4 [#allocation9]
        %566 = vst.msk [vmem:[%s565] sm:$0xf] %vm539, %v563
        %567 = vrot.lane.b32.xlu0 %v543, 112
        %v568 = vpop.permute.xlu0 %567
        %s570 = scalar_lea.vmem %s401, 8 [#allocation6]
        %571 = vst.msk [vmem:[%s570] sm:$0xf] %vm539, %v568
        %572 = vrot.lane.b32.xlu0 %v543, 80
        %v573 = vpop.permute.xlu0 %572
        %s575 = scalar_lea.vmem %s408, 8 [#allocation8]
        %576 = vst.msk [vmem:[%s575] sm:$0xf] %vm539, %v573
        %577 = vrot.lane.b32.xlu0 %v543, 48
        %v578 = vpop.permute.xlu0 %577
        %s580 = scalar_lea.vmem %s415, 8 [#allocation9]
        %581 = vst.msk [vmem:[%s580] sm:$0xf] %vm539, %v578
        %582 = vrot.lane.b32.xlu0 %v543, 104
        %v583 = vpop.permute.xlu0 %582
        %s585 = scalar_lea.vmem %s401, 12 [#allocation6]
        %586 = vst.msk [vmem:[%s585] sm:$0xf] %vm539, %v583
        %587 = vrot.lane.b32.xlu0 %v543, 72
        %v588 = vpop.permute.xlu0 %587
        %s590 = scalar_lea.vmem %s408, 12 [#allocation8]
        %591 = vst.msk [vmem:[%s590] sm:$0xf] %vm539, %v588
        %592 = vrot.lane.b32.xlu0 %v543, 40
        %v593 = vpop.permute.xlu0 %592
        %s595 = scalar_lea.vmem %s415, 12 [#allocation9]
        %596 = vst.msk [vmem:[%s595] sm:$0xf] %vm539, %v593
        %s597 = sand.u32 %s193, 1
        %s598 = scalar_lea.sflag [#allocation4], %s597
        %s599 = sand.u32 %s193, 1
        %s600 = smul.addr %s599, 8
        %s601 = scalar_lea.vmem [#allocation5], %s600
        %s602 = sand.u32 %s31, 1
        %s603 = scalar_lea.sflag [#allocation7], %s602
        %s604 = sand.u32 %s221, 1
        %s605 = smul.addr %s604, 16
        %s606 = scalar_lea.vmem [#allocation6], %s605
        %s607 = sand.u32 %s31, 1
        %s608 = scalar_lea.sflag [#allocation7], %s607
        %s609 = sand.u32 %s249, 1
        %s610 = smul.addr %s609, 16
        %s611 = scalar_lea.vmem [#allocation8], %s610
        %s612 = sand.u32 %s277, 1
        %s613 = scalar_lea.sflag [#allocation10], %s612
        %s614 = sand.u32 %s277, 1
        %s615 = smul.addr %s614, 16
        %s616 = scalar_lea.vmem [#allocation9], %s615
        // Predicated region
        $region49: #{tpu_custom_call.1} parent=43 // pred_check
          %p617 = pneg %p203
        $region50: #{tpu_custom_call.1} parent=43 // pred_check_branch
          %619 = sbr.rel (%p617) target = $region52
        $region51: #{tpu_custom_call.1} parent=43 // pred_region
          %s621 = ssub.s32 128, 128
          %622 = vsyncadd %s598, %s621
          %s623 = sadd.s32 %s36, %s35
          %s624 = smul.addr %s623, 128
          %s625 = scalar_lea.hbm %s6, %s624
          %s627 = sshll.u32 %s601, 4
          %s628 = int_to_ptr.vmem [resolvable:$true] %s627
          %630 = dma.vmem_to_hbm [thread:$0]  %s628, 128, %s625, %s598
        $region52: #{tpu_custom_call.1} parent=43 // pred_fallthru
          _
        // Predicated region
        $region53: #{tpu_custom_call.1} parent=43 // pred_check
          %p631 = pneg %p231
        $region54: #{tpu_custom_call.1} parent=43 // pred_check_branch
          %633 = sbr.rel (%p631) target = $region56
        $region55: #{tpu_custom_call.1} parent=43 // pred_region
          %s635 = ssub.s32 256, 256
          %636 = vsyncadd %s603, %s635
          %s637 = smul.addr %s35, 4
          %s638 = sadd.s32 %s36, %s637
          %s639 = smul.addr %s638, 64
          %s640 = scalar_lea.hbm %s7, %s639
          %s641 = sshll.u32 %s606, 4
          %s642 = int_to_ptr.vmem [resolvable:$true] %s641
          %647 = dma.vmem_to_hbm [thread:$0]  %s642, 256, %s640, %s603, 64, 64, 4
        $region56: #{tpu_custom_call.1} parent=43 // pred_fallthru
          _
        // Predicated region
        $region57: #{tpu_custom_call.1} parent=43 // pred_check
          %p648 = pneg %p259
        $region58: #{tpu_custom_call.1} parent=43 // pred_check_branch
          %650 = sbr.rel (%p648) target = $region60
        $region59: #{tpu_custom_call.1} parent=43 // pred_region
          %s652 = ssub.s32 256, 256
          %653 = vsyncadd %s608, %s652
          %s654 = smul.addr %s35, 4
          %s655 = sadd.s32 %s36, %s654
          %s656 = smul.addr %s655, 64
          %s657 = scalar_lea.hbm %s8, %s656
          %s658 = sshll.u32 %s611, 4
          %s659 = int_to_ptr.vmem [resolvable:$true] %s658
          %664 = dma.vmem_to_hbm [thread:$0]  %s659, 256, %s657, %s608, 64, 64, 4
        $region60: #{tpu_custom_call.1} parent=43 // pred_fallthru
          _
        // Predicated region
        $region61: #{tpu_custom_call.1} parent=43 // pred_check
          %p665 = pneg %p287
        $region62: #{tpu_custom_call.1} parent=43 // pred_check_branch
          %667 = sbr.rel (%p665) target = $region64
        $region63: #{tpu_custom_call.1} parent=43 // pred_region
          %s669 = ssub.s32 256, 256
          %670 = vsyncadd %s613, %s669
          %s671 = smul.addr %s35, 4
          %s672 = sadd.s32 %s36, %s671
          %s673 = smul.addr %s672, 64
          %s674 = scalar_lea.hbm %s9, %s673
          %s675 = sshll.u32 %s616, 4
          %s676 = int_to_ptr.vmem [resolvable:$true] %s675
          %681 = dma.vmem_to_hbm [thread:$0]  %s676, 256, %s674, %s613, 64, 64, 4
        $region64: #{tpu_custom_call.1} parent=43 // pred_fallthru
          _
      $region44: #{tpu_custom_call.1} parent=5 // pred_fallthru
        _
      %p682 = scmp.le.s32.totalorder 2, %s26
      // Predicated region
      $region65: #{tpu_custom_call.1} parent=5 // pred_check
        %p683 = pneg %p682
      $region66: #{tpu_custom_call.1} parent=5 // pred_check_branch
        %685 = sbr.rel (%p683) target = $region68
      $region67: #{tpu_custom_call.1} parent=5 // pred_region
        %s686 = ssub.s32 %s26, 2
        // Predicated region
        $region69: #{tpu_custom_call.1} parent=67 // pred_check
          %p687 = pneg %p209
        $region70: #{tpu_custom_call.1} parent=67 // pred_check_branch
          %689 = sbr.rel (%p687) target = $region72
        $region71: #{tpu_custom_call.1} parent=67 // pred_region
          %s690 = sand.u32 %s194, 1
          %s691 = scalar_lea.sflag [#allocation4], %s690
          %s692 = sand.u32 %s194, 1
          %s693 = smul.addr %s692, 8
          %s694 = scalar_lea.vmem [#allocation5], %s693
          %695 = dma.done %s691, 128
        $region72: #{tpu_custom_call.1} parent=67 // pred_fallthru
          _
        // Predicated region
        $region73: #{tpu_custom_call.1} parent=67 // pred_check
          %p696 = pneg %p237
        $region74: #{tpu_custom_call.1} parent=67 // pred_check_branch
          %698 = sbr.rel (%p696) target = $region76
        $region75: #{tpu_custom_call.1} parent=67 // pred_region
          %s699 = sand.u32 %s32, 1
          %s700 = scalar_lea.sflag [#allocation7], %s699
          %s701 = sand.u32 %s222, 1
          %s702 = smul.addr %s701, 16
          %s703 = scalar_lea.vmem [#allocation6], %s702
          %704 = dma.done %s700, 256
        $region76: #{tpu_custom_call.1} parent=67 // pred_fallthru
          _
        // Predicated region
        $region77: #{tpu_custom_call.1} parent=67 // pred_check
          %p705 = pneg %p265
        $region78: #{tpu_custom_call.1} parent=67 // pred_check_branch
          %707 = sbr.rel (%p705) target = $region80
        $region79: #{tpu_custom_call.1} parent=67 // pred_region
          %s708 = sand.u32 %s32, 1
          %s709 = scalar_lea.sflag [#allocation7], %s708
          %s710 = sand.u32 %s250, 1
          %s711 = smul.addr %s710, 16
          %s712 = scalar_lea.vmem [#allocation8], %s711
          %713 = dma.done %s709, 256
        $region80: #{tpu_custom_call.1} parent=67 // pred_fallthru
          _
        // Predicated region
        $region81: #{tpu_custom_call.1} parent=67 // pred_check
          %p714 = pneg %p293
        $region82: #{tpu_custom_call.1} parent=67 // pred_check_branch
          %716 = sbr.rel (%p714) target = $region84
        $region83: #{tpu_custom_call.1} parent=67 // pred_region
          %s717 = sand.u32 %s278, 1
          %s718 = scalar_lea.sflag [#allocation10], %s717
          %s719 = sand.u32 %s278, 1
          %s720 = smul.addr %s719, 16
          %s721 = scalar_lea.vmem [#allocation9], %s720
          %722 = dma.done %s718, 256
        $region84: #{tpu_custom_call.1} parent=67 // pred_fallthru
          _
      $region68: #{tpu_custom_call.1} parent=5 // pred_fallthru
        _
    $region6: #{tpu_custom_call.1} parent=1 // loop_footer
      %s30 = sadd.s32 1, %s26
    $region7: #{tpu_custom_call.1} parent=1 // loop_footer_branch
      %25 = sbr.rel target = $region3
    $region8: #{tpu_custom_call.1} parent=1 // loop_exit
      _
    %723 = vsyncpa [#allocation3], 1
    %s724 = scalar_lea.sflag [#allocation3], 1
    %725 = vsyncpa %s724, 1
    %726 = vsyncpa [#allocation4], 1
    %s727 = scalar_lea.sflag [#allocation4], 1
    %728 = vsyncpa %s727, 1
    %729 = vsyncpa [#allocation7], 1
    %s730 = scalar_lea.sflag [#allocation7], 1
    %731 = vsyncpa %s730, 1
    %732 = vsyncpa [#allocation10], 1
    %s733 = scalar_lea.sflag [#allocation10], 1
    %734 = vsyncpa %s733, 1

</llo_original>
